<compile_context>
chip_gen: v7x
topology: tpu7x:2x2x1
jax: 0.10.0
libtpu: 0.0.40
codegen_flags: <defaults>
</compile_context>

<pallas_src>
import functools

import jax
import jax.numpy as jnp
from jax.experimental import pallas as pl
from jax.experimental.pallas import tpu as pltpu


def _ce_kernel(logits_ref, target_ref, out_ref, *, hw, s_tile, b_tile, out_lane, need_mask):
    """One grid step: b_tile images (grid axis 0) x one spatial tile (grid axis 1).

    logits_ref : (b_tile, C, S_TILE) native dtype (NCHW slab, no transpose)
    target_ref : (b_tile, S_TILE)    int32
    out_ref    : (1, out_lane)       float32 lane-dense per-step partial sum
    """
    c = logits_ref.shape[1]

    if need_mask:
        # only compiled in when the last spatial block is partial
        col = (pl.program_id(1) * s_tile
               + jax.lax.broadcasted_iota(jnp.int32, (1, s_tile), 1))
        valid = col < hw                                            # (1, S)

    cls = jax.lax.broadcasted_iota(jnp.int32, (c, s_tile), 0)       # (C, S) class ids
    t_all = target_ref[...]                                         # (B, S) int32 (small)

    acc = jnp.zeros((1, s_tile), jnp.float32)
    for bi in range(b_tile):                                        # small static unroll (<= 8)
        x = logits_ref[bi].astype(jnp.float32)                      # (C, S) f32 math in-kernel
        t = t_all[bi:bi + 1, :]                                     # (1, S)
        if need_mask:
            # zero the garbage tail columns before exp -> no Inf/NaN from undefined data
            x = jnp.where(valid, x, 0.0)

        # numerically-stable log-sum-exp over the channel (sublane) axis
        m = jnp.max(x, axis=0, keepdims=True)                       # (1, S)
        lse = m + jnp.log(jnp.sum(jnp.exp(x - m), axis=0, keepdims=True))

        # gather the target logit via a one-hot select over the channel axis
        tgt_logit = jnp.sum(jnp.where(cls == t, x, 0.0), axis=0, keepdims=True)

        loss = lse - tgt_logit                                      # (1, S) per-pixel NLL
        if need_mask:
            loss = jnp.where(valid, loss, 0.0)
        acc = acc + loss

    # fold S_TILE lanes -> out_lane lanes with vreg-aligned static slices (pure VPU adds)
    partial = acc[:, 0:out_lane]
    for k in range(1, s_tile // out_lane):
        partial = partial + acc[:, k * out_lane:(k + 1) * out_lane]
    out_ref[...] = partial


def _vmem_limit_bytes():
    """~48 MiB on v7x (64 MiB physical VMEM), 64 MiB on v5e/v6e (128 MiB physical)."""
    cap = 64 * 1024 * 1024                      # conservative fallback = v7x physical VMEM
    try:
        info = pltpu.get_tpu_info()
        cap = int(getattr(info, "vmem_capacity_bytes", cap))
    except Exception:
        pass
    return min(64 * 1024 * 1024, (cap * 3) // 4)


def _pick_tiles(n, c, hw, itemsize, vmem_limit):
    """Pick (b_tile, s_tile, num_tiles, out_lane) from a byte budget, not an element cap."""
    # VMEM cost per logits element: double-buffered native-dtype input block + ~3 f32
    # temporaries (x, exp(x-m), one-hot select) + amortized target/output buffers.
    per_elem = 2 * itemsize + 12 + (12 + c - 1) // c
    budget = max(1 << 20, vmem_limit - (4 << 20))      # headroom for compiler scratch
    max_elems = budget // per_elem

    if hw <= 128:
        s_tile = hw                                    # whole (tiny) spatial extent, 1 tile
    else:
        s_tile = max(128, min((hw // 128) * 128, (max_elems // c) // 128 * 128))
        if n < 8:
            # keep >= ~8 grid steps so both v7x TensorCores get balanced work
            needed = -(-8 // n)
            s_tile = min(s_tile, max(128, (hw // needed) // 128 * 128))
    num_tiles = -(-hw // s_tile)

    # batch-tile small images so each step still moves a healthy DMA (b_tile | n, <= 8)
    b_tile = 1
    target_bytes = 1 << 20
    step_elems = c * s_tile
    for d in range(2, min(n, 8) + 1):
        if n % d != 0:
            continue
        if d * step_elems > max_elems:
            break
        if b_tile * step_elems * itemsize >= target_bytes:
            break
        if (n // d) * num_tiles < 2 and n * num_tiles >= 2:
            break
        b_tile = d

    out_lane = 128 if s_tile >= 128 else s_tile
    return b_tile, s_tile, num_tiles, out_lane


def cross_entropy_loss(logits_nchw, target_nhw):
    """Equivalent of F.cross_entropy(input, target) for 4-D NCHW logits (mean reduction)."""
    n, c, h, w = logits_nchw.shape
    assert target_nhw.shape == (n, h, w)
    hw = h * w
    itemsize = jnp.dtype(logits_nchw.dtype).itemsize

    # free reshapes on the contiguous NCHW layout -- no transpose, no dtype cast, no pad
    logits = logits_nchw.reshape(n, c, hw)
    target = target_nhw.reshape(n, hw).astype(jnp.int32)

    vmem_limit = _vmem_limit_bytes()
    b_tile, s_tile, num_tiles, out_lane = _pick_tiles(n, c, hw, itemsize, vmem_limit)
    need_mask = num_tiles * s_tile != hw               # last spatial block is partial
    n_b = n // b_tile

    kernel = functools.partial(_ce_kernel, hw=hw, s_tile=s_tile, b_tile=b_tile,
                               out_lane=out_lane, need_mask=need_mask)

    out_bytes = n_b * num_tiles * out_lane * 4
    cost = pl.CostEstimate(
        flops=6 * n * c * hw,
        transcendentals=n * c * hw + n * hw,
        bytes_accessed=n * c * hw * itemsize + n * hw * 4 + out_bytes,
    )

    partials = pl.pallas_call(
        kernel,
        out_shape=jax.ShapeDtypeStruct((n_b, num_tiles * out_lane), jnp.float32),
        grid_spec=pltpu.PrefetchScalarGridSpec(
            num_scalar_prefetch=0,
            grid=(n_b, num_tiles),
            in_specs=[
                pl.BlockSpec((b_tile, c, s_tile), lambda i, j: (i, 0, j)),
                pl.BlockSpec((b_tile, s_tile), lambda i, j: (i, j)),
            ],
            out_specs=pl.BlockSpec((1, out_lane), lambda i, j: (i, j)),
        ),
        compiler_params=pltpu.CompilerParams(
            # no cross-step carry -> both axes independent (shards across v7x's 2 TCs)
            dimension_semantics=("parallel", "parallel"),
            vmem_limit_bytes=vmem_limit,
        ),
        cost_estimate=cost,
    )(logits, target)

    # tiny final reduction + mean (weight=None, reduction='mean')
    return jnp.sum(partials) / jnp.float32(n * hw)


def _reference_cross_entropy(logits_nchw, target_nhw):
    n, c, h, w = logits_nchw.shape
    logits = jnp.transpose(logits_nchw, (0, 2, 3, 1)).reshape(-1, c).astype(jnp.float32)
    tgt = target_nhw.reshape(-1)
    logp = jax.nn.log_softmax(logits, axis=-1)
    nll = -jnp.take_along_axis(logp, tgt[:, None], axis=-1)[:, 0]
    return jnp.mean(nll)


if __name__ == "__main__":
    key = jax.random.PRNGKey(0)
    k1, k2 = jax.random.split(key)

    N, C, H, W = 2, 4, 16, 16
    x = jax.random.normal(k1, (N, C, H, W), dtype=jnp.float32)
    target = jax.random.randint(k2, (N, H, W), 0, C, dtype=jnp.int32)

    loss = jax.block_until_ready(cross_entropy_loss(x, target))
    ref = jax.block_until_ready(_reference_cross_entropy(x, target))
    assert jnp.allclose(loss, ref, rtol=1e-5, atol=1e-5), (loss, ref)

    print("KERNEL_OK")
</pallas_src>

<mosaic_0001>
module attributes {stable_mosaic.version = 11 : i64} {
  func.func @_ce_kernel(%arg0: i32, %arg1: i32, %arg2: memref<2x4x128xf32, #tpu.memory_space<vmem>>, %arg3: memref<2x128xi32, #tpu.memory_space<vmem>>, %arg4: memref<1x128xf32, #tpu.memory_space<vmem>>) attributes {dimension_semantics = [#tpu.dimension_semantics<parallel>, #tpu.dimension_semantics<parallel>], iteration_bounds = array<i64: 1, 2>, scalar_prefetch = 0 : i64, scratch_operands = 0 : i64, tpu.core_type = #tpu.core_type<tc>, window_params = [{transform_indices = @transform_0, window_bounds = array<i64: 2, 4, 128>}, {transform_indices = @transform_1, window_bounds = array<i64: 2, 128>}, {transform_indices = @transform_2, window_bounds = array<i64: 1, 128>}]} {
    %0 = tpu.iota {dimensions = array<i32: 0>} : vector<4x128xi32>
    %c0 = arith.constant 0 : index
    %c0_0 = arith.constant 0 : index
    %1 = vector.load %arg3[%c0, %c0_0] : memref<2x128xi32, #tpu.memory_space<vmem>>, vector<2x128xi32>
    %cst = arith.constant 0.000000e+00 : f32
    %2 = vector.broadcast %cst : f32 to vector<1x128xf32>
    %c0_1 = arith.constant 0 : index
    %c0_2 = arith.constant 0 : index
    %c0_3 = arith.constant 0 : index
    %3 = vector.load %arg2[%c0_1, %c0_2, %c0_3] : memref<2x4x128xf32, #tpu.memory_space<vmem>>, vector<1x4x128xf32>
    %4 = vector.shape_cast %3 : vector<1x4x128xf32> to vector<4x128xf32>
    %5 = vector.extract_strided_slice %1 {offsets = [0, 0], sizes = [1, 128], strides = [1, 1]} : vector<2x128xi32> to vector<1x128xi32>
    %cst_4 = arith.constant dense<0xFF800000> : vector<128xf32>
    %6 = vector.multi_reduction <maximumf>, %4, %cst_4 [0] : vector<4x128xf32> to vector<128xf32>
    %7 = vector.shape_cast %6 : vector<128xf32> to vector<1x128xf32>
    %8 = vector.broadcast %7 : vector<1x128xf32> to vector<4x128xf32>
    %9 = arith.subf %4, %8 : vector<4x128xf32>
    %10 = math.exp %9 : vector<4x128xf32>
    %cst_5 = arith.constant dense<0.000000e+00> : vector<128xf32>
    %11 = vector.multi_reduction <add>, %10, %cst_5 [0] : vector<4x128xf32> to vector<128xf32>
    %12 = vector.shape_cast %11 : vector<128xf32> to vector<1x128xf32>
    %13 = math.log %12 : vector<1x128xf32>
    %14 = arith.addf %7, %13 : vector<1x128xf32>
    %15 = vector.broadcast %5 : vector<1x128xi32> to vector<4x128xi32>
    %16 = arith.cmpi eq, %0, %15 : vector<4x128xi32>
    %cst_6 = arith.constant 0.000000e+00 : f32
    %17 = vector.broadcast %cst_6 : f32 to vector<4x128xf32>
    %18 = arith.select %16, %4, %17 : vector<4x128xi1>, vector<4x128xf32>
    %cst_7 = arith.constant dense<0.000000e+00> : vector<128xf32>
    %19 = vector.multi_reduction <add>, %18, %cst_7 [0] : vector<4x128xf32> to vector<128xf32>
    %20 = vector.shape_cast %19 : vector<128xf32> to vector<1x128xf32>
    %21 = arith.subf %14, %20 : vector<1x128xf32>
    %22 = arith.addf %2, %21 : vector<1x128xf32>
    %c1 = arith.constant 1 : index
    %c0_8 = arith.constant 0 : index
    %c0_9 = arith.constant 0 : index
    %23 = vector.load %arg2[%c1, %c0_8, %c0_9] : memref<2x4x128xf32, #tpu.memory_space<vmem>>, vector<1x4x128xf32>
    %24 = vector.shape_cast %23 : vector<1x4x128xf32> to vector<4x128xf32>
    %25 = vector.extract_strided_slice %1 {offsets = [1, 0], sizes = [1, 128], strides = [1, 1]} : vector<2x128xi32> to vector<1x128xi32>
    %cst_10 = arith.constant dense<0xFF800000> : vector<128xf32>
    %26 = vector.multi_reduction <maximumf>, %24, %cst_10 [0] : vector<4x128xf32> to vector<128xf32>
    %27 = vector.shape_cast %26 : vector<128xf32> to vector<1x128xf32>
    %28 = vector.broadcast %27 : vector<1x128xf32> to vector<4x128xf32>
    %29 = arith.subf %24, %28 : vector<4x128xf32>
    %30 = math.exp %29 : vector<4x128xf32>
    %cst_11 = arith.constant dense<0.000000e+00> : vector<128xf32>
    %31 = vector.multi_reduction <add>, %30, %cst_11 [0] : vector<4x128xf32> to vector<128xf32>
    %32 = vector.shape_cast %31 : vector<128xf32> to vector<1x128xf32>
    %33 = math.log %32 : vector<1x128xf32>
    %34 = arith.addf %27, %33 : vector<1x128xf32>
    %35 = vector.broadcast %25 : vector<1x128xi32> to vector<4x128xi32>
    %36 = arith.cmpi eq, %0, %35 : vector<4x128xi32>
    %cst_12 = arith.constant 0.000000e+00 : f32
    %37 = vector.broadcast %cst_12 : f32 to vector<4x128xf32>
    %38 = arith.select %36, %24, %37 : vector<4x128xi1>, vector<4x128xf32>
    %cst_13 = arith.constant dense<0.000000e+00> : vector<128xf32>
    %39 = vector.multi_reduction <add>, %38, %cst_13 [0] : vector<4x128xf32> to vector<128xf32>
    %40 = vector.shape_cast %39 : vector<128xf32> to vector<1x128xf32>
    %41 = arith.subf %34, %40 : vector<1x128xf32>
    %42 = arith.addf %22, %41 : vector<1x128xf32>
    %c0_14 = arith.constant 0 : index
    %c0_15 = arith.constant 0 : index
    %43 = vector.load %arg4[%c0_14, %c0_15] : memref<1x128xf32, #tpu.memory_space<vmem>>, vector<1x128xf32>
    tpu.vector_store %arg4[%c0_14, %c0_15], %42 {strides = array<i32>} : memref<1x128xf32, #tpu.memory_space<vmem>>, vector<1x128xf32>,
    return
  }
  func.func @transform_0(%arg0: i32, %arg1: i32) -> (i32, i32, i32) {
    %c0_i32 = arith.constant 0 : i32
    %c0_i32_0 = arith.constant 0 : i32
    return %arg0, %c0_i32, %arg1 : i32, i32, i32
  }
  func.func @transform_1(%arg0: i32, %arg1: i32) -> (i32, i32) {
    %c0_i32 = arith.constant 0 : i32
    return %arg0, %arg1 : i32, i32
  }
  func.func @transform_2(%arg0: i32, %arg1: i32) -> (i32, i32) {
    %c0_i32 = arith.constant 0 : i32
    return %arg0, %arg1 : i32, i32
  }
}

</mosaic_0001>

<llo_original>
// kernel: tpu_custom_call.1
$region0: #{tpu_custom_call.1}
  #allocation0 [shape = 'u32[]', space=smem, size = 0x4, offset = 0x4, fixed_abs, tag = 'smem constant byte address 0x4 - core index']
  #allocation1 [shape = 'u32[144,128]{1,0:T(1,128)}', space=vmem, size = 0x12000, scoped, tag = 'internal scratch']
  %s0 = inlined_call_operand.hbm [shape: f32[2,4,256], index: 0, kind: input, shape index: {}]
  %s1 = inlined_call_operand.hbm [shape: s32[2,256], index: 1, kind: input, shape index: {}]
  %s2 = inlined_call_operand.hbm [shape: f32[1,256], index: 2, kind: output, shape index: {}]
  %s3 = sld [smem:[#allocation0]]
  $region49: #{tpu_custom_call.1} parent=0
    _
  %s5 = ssub.s32 1, %s3
  %s6 = scalar_select 0, %s5, %s3
  $region1: #{tpu_custom_call.1} parent=0
    #allocation2 [shape = 'u8[8192]{0}', space=vmem, size = 0x2000, scoped, tag = 'input window, operand 0']
    #allocation3 [shape = 's32[2]{0}', space=sflag, size = 0x8, scoped, tag = 'scoped memory for tpu_custom_call.1']
    #allocation4 [shape = 's32[2]{0}', space=sflag, size = 0x8, scoped, tag = 'scoped memory for tpu_custom_call.1']
    #allocation5 [shape = 'u8[2048]{0}', space=vmem, size = 0x800, scoped, tag = 'input window, operand 1']
    #allocation6 [shape = 's32[2]{0}', space=sflag, size = 0x8, scoped, tag = 'scoped memory for tpu_custom_call.1']
    #allocation7 [shape = 'u8[1024]{0}', space=vmem, size = 0x400, scoped, tag = 'output window, operand 0']
    %7 = vsyncpa [#allocation3], 0
    %s8 = scalar_lea.sflag [#allocation3], 1
    %9 = vsyncpa %s8, 0
    %10 = vsyncpa [#allocation6], 0
    %s11 = scalar_lea.sflag [#allocation6], 1
    %12 = vsyncpa %s11, 0
    %13 = vsyncpa [#allocation4], 0
    %s14 = scalar_lea.sflag [#allocation4], 1
    %15 = vsyncpa %s14, 0
    loop: start=0, step=1, limit=4
    $region2: #{tpu_custom_call.1} parent=1 // loop_pre_header
      _
    $region3: #{tpu_custom_call.1} parent=1 // loop_header
      %s17 = sphi 0, %s21
      %p18 = scmp.ge.s32.totalorder %s17, 4
      %s24 = sphi 0, %s36
      %s25 = sphi 0, %s32
      %s26 = sphi 0, %s24
      %s27 = sphi 0, %s25
      %s28 = sphi 0, %s26
      %s29 = sphi 0, %s27
      %s41 = sphi 0, %s43
      %s44 = sphi 0, %s41
      %s45 = sphi 0, %s44
      %s61 = sphi 0, %s45
      %s69 = sphi 0, %s71
      %s72 = sphi 0, %s69
      %s73 = sphi 0, %s72
      %s89 = sphi 0, %s73
      %s97 = sphi 0, %s99
      %s100 = sphi 0, %s97
      %s101 = sphi 0, %s100
      %s117 = sphi 0, %s101
    $region4: #{tpu_custom_call.1} parent=1 // loop_header_branch
      %20 = sbr.rel (%p18) target = $region8
    $region5: #{tpu_custom_call.1} parent=1 // loop_body
      %s22 = ssub.s32 %s17, 1
      %s23 = ssub.s32 %s17, 2
      %s30 = sadd.s32 1, %s25
      %p31 = scmp.ge.s32.totalorder %s30, 2
      %s32 = scalar_select %p31, 0, %s30
      %s33 = sadd.s32 1, %s24
      %s34 = scalar_select %p31, %s33, %s24
      %p35 = scmp.ge.s32.totalorder %s34, 1
      %s36 = scalar_select %p35, 0, %s34
      %s37 = ssub.s32 %s24, %s36
      %s38 = ssub.s32 %s25, %s32
      %s39 = sor.u32 %s37, %s38
      %p40 = scmp.eq.s32.totalorder %s39, 0
      %s42 = sadd.s32 %s41, 1
      %s43 = scalar_select %p40, %s41, %s42
      %p46 = pneg %p40
      %p47 = scmp.eq.s32.totalorder %s17, 1
      %p48 = por %p46, %p47
      %p49 = scmp.ne.s32.totalorder %s41, %s44
      %p50 = scmp.eq.s32.totalorder %s17, 0
      %p51 = por %p49, %p50
      %p52 = scmp.ne.s32.totalorder %s41, %s44
      %p53 = scmp.eq.s32.totalorder %s22, 1
      %p54 = por %p52, %p53
      %p55 = scmp.ne.s32.totalorder %s44, %s45
      %p56 = scmp.eq.s32.totalorder %s22, 0
      %p57 = por %p55, %p56
      %p58 = scmp.ne.s32.totalorder %s44, %s45
      %p59 = scmp.eq.s32.totalorder %s23, 1
      %p60 = por %p58, %p59
      %p62 = scmp.ne.s32.totalorder %s45, %s61
      %p63 = scmp.eq.s32.totalorder %s23, 0
      %p64 = por %p62, %p63
      %s65 = ssub.s32 %s24, %s36
      %s66 = ssub.s32 %s25, %s32
      %s67 = sor.u32 %s65, %s66
      %p68 = scmp.eq.s32.totalorder %s67, 0
      %s70 = sadd.s32 %s69, 1
      %s71 = scalar_select %p68, %s69, %s70
      %p74 = pneg %p68
      %p75 = scmp.eq.s32.totalorder %s17, 1
      %p76 = por %p74, %p75
      %p77 = scmp.ne.s32.totalorder %s69, %s72
      %p78 = scmp.eq.s32.totalorder %s17, 0
      %p79 = por %p77, %p78
      %p80 = scmp.ne.s32.totalorder %s69, %s72
      %p81 = scmp.eq.s32.totalorder %s22, 1
      %p82 = por %p80, %p81
      %p83 = scmp.ne.s32.totalorder %s72, %s73
      %p84 = scmp.eq.s32.totalorder %s22, 0
      %p85 = por %p83, %p84
      %p86 = scmp.ne.s32.totalorder %s72, %s73
      %p87 = scmp.eq.s32.totalorder %s23, 1
      %p88 = por %p86, %p87
      %p90 = scmp.ne.s32.totalorder %s73, %s89
      %p91 = scmp.eq.s32.totalorder %s23, 0
      %p92 = por %p90, %p91
      %s93 = ssub.s32 %s24, %s36
      %s94 = ssub.s32 %s25, %s32
      %s95 = sor.u32 %s93, %s94
      %p96 = scmp.eq.s32.totalorder %s95, 0
      %s98 = sadd.s32 %s97, 1
      %s99 = scalar_select %p96, %s97, %s98
      %p102 = pneg %p96
      %p103 = scmp.eq.s32.totalorder %s17, 1
      %p104 = por %p102, %p103
      %p105 = scmp.ne.s32.totalorder %s97, %s100
      %p106 = scmp.eq.s32.totalorder %s17, 0
      %p107 = por %p105, %p106
      %p108 = scmp.ne.s32.totalorder %s97, %s100
      %p109 = scmp.eq.s32.totalorder %s22, 1
      %p110 = por %p108, %p109
      %p111 = scmp.ne.s32.totalorder %s100, %s101
      %p112 = scmp.eq.s32.totalorder %s22, 0
      %p113 = por %p111, %p112
      %p114 = scmp.ne.s32.totalorder %s100, %s101
      %p115 = scmp.eq.s32.totalorder %s23, 1
      %p116 = por %p114, %p115
      %p118 = scmp.ne.s32.totalorder %s101, %s117
      %p119 = scmp.eq.s32.totalorder %s23, 0
      %p120 = por %p118, %p119
      %p121 = scmp.le.s32.totalorder 1, %s17
      %p122 = scmp.lt.s32.totalorder %s17, 3
      %p123 = pnand %p121, %p122
      %p124 = pneg %p123
      // Predicated region
      $region9: #{tpu_custom_call.1} parent=5 // pred_check
        _
      $region10: #{tpu_custom_call.1} parent=5 // pred_check_branch
        %126 = sbr.rel (%p123) target = $region12
      $region11: #{tpu_custom_call.1} parent=5 // pred_region
        %s127 = ssub.s32 %s17, 1
      $region12: #{tpu_custom_call.1} parent=5 // pred_fallthru
        _
      %p128 = scmp.lt.s32.totalorder %s17, 2
      // Predicated region
      $region13: #{tpu_custom_call.1} parent=5 // pred_check
        %p129 = pneg %p128
      $region14: #{tpu_custom_call.1} parent=5 // pred_check_branch
        %131 = sbr.rel (%p129) target = $region16
      $region15: #{tpu_custom_call.1} parent=5 // pred_region
        // Predicated region
        $region17: #{tpu_custom_call.1} parent=15 // pred_check
          %p132 = pneg %p51
        $region18: #{tpu_custom_call.1} parent=15 // pred_check_branch
          %134 = sbr.rel (%p132) target = $region20
        $region19: #{tpu_custom_call.1} parent=15 // pred_region
          %s135 = sand.u32 %s41, 1
          %s136 = scalar_lea.sflag [#allocation3], %s135
          %s137 = sand.u32 %s41, 1
          %s138 = smul.addr %s137, 8
          %s139 = scalar_lea.vmem [#allocation2], %s138
          %s140 = smul.u32 2, %s24
          %s142 = ssub.s32 128, 128
          %143 = vsyncadd %s136, %s142
          %s144 = smul.addr %s140, 2
          %s145 = sadd.s32 %s25, %s144
          %s146 = smul.addr %s145, 64
          %s147 = scalar_lea.hbm %s0, %s146
          %s148 = sshll.u32 %s139, 4
          %s149 = int_to_ptr.vmem [resolvable:$true] %s148
          %154 = dma.hbm_to_vmem [thread:$0]  %s147, 128, %s149, %s136, 128, 64, 4
        $region20: #{tpu_custom_call.1} parent=15 // pred_fallthru
          _
        // Predicated region
        $region21: #{tpu_custom_call.1} parent=15 // pred_check
          %p155 = pneg %p79
        $region22: #{tpu_custom_call.1} parent=15 // pred_check_branch
          %157 = sbr.rel (%p155) target = $region24
        $region23: #{tpu_custom_call.1} parent=15 // pred_region
          %s158 = sand.u32 %s69, 1
          %s159 = scalar_lea.sflag [#allocation6], %s158
          %s160 = sand.u32 %s69, 1
          %s161 = smul.addr %s160, 2
          %s162 = scalar_lea.vmem [#allocation5], %s161
          %s164 = ssub.s32 32, 32
          %165 = vsyncadd %s159, %s164
          %s166 = smul.addr %s24, 2
          %s167 = sadd.s32 %s25, %s166
          %s168 = smul.addr %s167, 32
          %s169 = scalar_lea.hbm %s1, %s168
          %s171 = sshll.u32 %s162, 4
          %s172 = int_to_ptr.vmem [resolvable:$true] %s171
          %174 = dma.hbm_to_vmem [thread:$0]  %s169, 32, %s172, %s159
        $region24: #{tpu_custom_call.1} parent=15 // pred_fallthru
          _
      $region16: #{tpu_custom_call.1} parent=5 // pred_fallthru
        _
      %p175 = scmp.le.s32.totalorder 1, %s17
      %p176 = scmp.lt.s32.totalorder %s17, 3
      %p177 = pnand %p175, %p176
      %p178 = pneg %p177
      // Predicated region
      $region25: #{tpu_custom_call.1} parent=5 // pred_check
        _
      $region26: #{tpu_custom_call.1} parent=5 // pred_check_branch
        %180 = sbr.rel (%p177) target = $region28
      $region27: #{tpu_custom_call.1} parent=5 // pred_region
        %s181 = ssub.s32 %s17, 1
        %s182 = sand.u32 %s44, 1
        %s183 = scalar_lea.sflag [#allocation3], %s182
        %s184 = sand.u32 %s44, 1
        %s185 = smul.addr %s184, 8
        %s186 = scalar_lea.vmem [#allocation2], %s185
        // Predicated region
        $region29: #{tpu_custom_call.1} parent=27 // pred_check
          %p187 = pneg %p57
        $region30: #{tpu_custom_call.1} parent=27 // pred_check_branch
          %189 = sbr.rel (%p187) target = $region32
        $region31: #{tpu_custom_call.1} parent=27 // pred_region
          %190 = dma.done %s183, 128
        $region32: #{tpu_custom_call.1} parent=27 // pred_fallthru
          _
        %s191 = sand.u32 %s72, 1
        %s192 = scalar_lea.sflag [#allocation6], %s191
        %s193 = sand.u32 %s72, 1
        %s194 = smul.addr %s193, 2
        %s195 = scalar_lea.vmem [#allocation5], %s194
        // Predicated region
        $region33: #{tpu_custom_call.1} parent=27 // pred_check
          %p196 = pneg %p85
        $region34: #{tpu_custom_call.1} parent=27 // pred_check_branch
          %198 = sbr.rel (%p196) target = $region36
        $region35: #{tpu_custom_call.1} parent=27 // pred_region
          %199 = dma.done %s192, 32
        $region36: #{tpu_custom_call.1} parent=27 // pred_fallthru
          _
        %s200 = sand.u32 %s44, 1
        %s201 = scalar_lea.sflag [#allocation3], %s200
        %s202 = sand.u32 %s44, 1
        %s203 = smul.addr %s202, 8
        %s204 = scalar_lea.vmem [#allocation2], %s203
        %p205 = pneg %p57
        %p206 = pneg %p54
        %s207 = sand.u32 %s72, 1
        %s208 = scalar_lea.sflag [#allocation6], %s207
        %s209 = sand.u32 %s72, 1
        %s210 = smul.addr %s209, 2
        %s211 = scalar_lea.vmem [#allocation5], %s210
        %p212 = pneg %p85
        %p213 = pneg %p82
        %p214 = pneg %p113
        %p215 = pneg %p110
        %s216 = sand.u32 %s100, 1
        %s217 = scalar_lea.sflag [#allocation4], %s216
        %s218 = sand.u32 %s100, 1
        %s219 = scalar_lea.vmem [#allocation7], %s218
        %s220 = smul.u32 2, %s26
        %v221 = vlaneseq
        %v222 = vshrl.u32 %v221, 7
        %v223 = vld [vmem:[%s195] sm:$0x3]
        %v224 = vld [vmem:[%s186] sm:$0xf]
        %vm225 = vcmask 1043456
        %v226 = vsel %vm225, %v224, -inf
        %v227 = vrot.slane %v226, 4
        %v228 = vmax.f32 %v226, %v227
        %v229 = vrot.slane %v228, 2
        %v230 = vmax.f32 %v228, %v229
        %v231 = vrot.slane %v230, 1
        %v232 = vmax.f32 %v230, %v231
        %v233 = vsub.f32 %v224, %v232
        %v234 = vmul.f32 %v233, 1.442695
        %v235 = vpow.pop %v234
        %v236 = vsel %vm225, %v235, 0.0
        %v237 = vrot.slane %v236, 4
        %v238 = vadd.f32 %v236, %v237
        %v239 = vrot.slane %v238, 2
        %v240 = vadd.f32 %v238, %v239
        %v241 = vrot.slane %v240, 1
        %v242 = vadd.f32 %v240, %v241
        %v243 = vlog2.pop %v242
        %v244 = vmul.f32 %v243, 0.6931472
        %v245 = vadd.f32 %v232, %v244
        %v246 = vlaneseq
        %v247 = vshrl.u32 %v246, 7
        %v248 = vsub.s32 0, %v247
        %v249 = vrot.slane %v223, %v248
        %vm250 = vcmp.eq.s32.totalorder %v222, %v249
        %v251 = vsel %vm250, %v224, 0.0
        %v252 = vsel %vm225, %v251, 0.0
        %v253 = vrot.slane %v252, 4
        %v254 = vadd.f32 %v252, %v253
        %v255 = vrot.slane %v254, 2
        %v256 = vadd.f32 %v254, %v255
        %v257 = vrot.slane %v256, 1
        %v258 = vadd.f32 %v256, %v257
        %v259 = vsub.f32 %v245, %v258
        %v260 = vadd.f32 %v259, 0.0
        %s261 = scalar_lea.vmem %s186, 4 [#allocation2]
        %v262 = vld [vmem:[%s261] sm:$0xf]
        %v263 = vsel %vm225, %v262, -inf
        %v264 = vrot.slane %v263, 4
        %v265 = vmax.f32 %v263, %v264
        %v266 = vrot.slane %v265, 2
        %v267 = vmax.f32 %v265, %v266
        %v268 = vrot.slane %v267, 1
        %v269 = vmax.f32 %v267, %v268
        %v270 = vsub.f32 %v262, %v269
        %v271 = vmul.f32 %v270, 1.442695
        %v272 = vpow.pop %v271
        %v273 = vsel %vm225, %v272, 0.0
        %v274 = vrot.slane %v273, 4
        %v275 = vadd.f32 %v273, %v274
        %v276 = vrot.slane %v275, 2
        %v277 = vadd.f32 %v275, %v276
        %v278 = vrot.slane %v277, 1
        %v279 = vadd.f32 %v277, %v278
        %v280 = vlog2.pop %v279
        %v281 = vmul.f32 %v280, 0.6931472
        %v282 = vadd.f32 %v269, %v281
        %v283 = vlaneseq
        %v284 = vshrl.u32 %v283, 7
        %v285 = vsub.s32 1, %v284
        %v286 = vrot.slane %v223, %v285
        %vm287 = vcmp.eq.s32.totalorder %v222, %v286
        %v288 = vsel %vm287, %v262, 0.0
        %v289 = vsel %vm225, %v288, 0.0
        %v290 = vrot.slane %v289, 4
        %v291 = vadd.f32 %v289, %v290
        %v292 = vrot.slane %v291, 2
        %v293 = vadd.f32 %v291, %v292
        %v294 = vrot.slane %v293, 1
        %v295 = vadd.f32 %v293, %v294
        %v296 = vsub.f32 %v282, %v295
        %v297 = vadd.f32 %v260, %v296
        %298 = vst [vmem:[%s219] sm:$0x1] %v297
        %s299 = sand.u32 %s100, 1
        %s300 = scalar_lea.sflag [#allocation4], %s299
        %s301 = sand.u32 %s100, 1
        %s302 = scalar_lea.vmem [#allocation7], %s301
        // Predicated region
        $region37: #{tpu_custom_call.1} parent=27 // pred_check
          %p303 = pneg %p110
        $region38: #{tpu_custom_call.1} parent=27 // pred_check_branch
          %305 = sbr.rel (%p303) target = $region40
        $region39: #{tpu_custom_call.1} parent=27 // pred_region
          %s307 = ssub.s32 16, 16
          %308 = vsyncadd %s300, %s307
          %s309 = smul.addr %s26, 2
          %s310 = sadd.s32 %s27, %s309
          %s311 = smul.addr %s310, 16
          %s312 = scalar_lea.hbm %s2, %s311
          %s314 = sshll.u32 %s302, 4
          %s315 = int_to_ptr.vmem [resolvable:$true] %s314
          %317 = dma.vmem_to_hbm [thread:$0]  %s315, 16, %s312, %s300
        $region40: #{tpu_custom_call.1} parent=27 // pred_fallthru
          _
      $region28: #{tpu_custom_call.1} parent=5 // pred_fallthru
        _
      %p318 = scmp.le.s32.totalorder 2, %s17
      // Predicated region
      $region41: #{tpu_custom_call.1} parent=5 // pred_check
        %p319 = pneg %p318
      $region42: #{tpu_custom_call.1} parent=5 // pred_check_branch
        %321 = sbr.rel (%p319) target = $region44
      $region43: #{tpu_custom_call.1} parent=5 // pred_region
        %s322 = ssub.s32 %s17, 2
        // Predicated region
        $region45: #{tpu_custom_call.1} parent=43 // pred_check
          %p323 = pneg %p116
        $region46: #{tpu_custom_call.1} parent=43 // pred_check_branch
          %325 = sbr.rel (%p323) target = $region48
        $region47: #{tpu_custom_call.1} parent=43 // pred_region
          %s326 = sand.u32 %s101, 1
          %s327 = scalar_lea.sflag [#allocation4], %s326
          %s328 = sand.u32 %s101, 1
          %s329 = scalar_lea.vmem [#allocation7], %s328
          %330 = dma.done %s327, 16
        $region48: #{tpu_custom_call.1} parent=43 // pred_fallthru
          _
      $region44: #{tpu_custom_call.1} parent=5 // pred_fallthru
        _
    $region6: #{tpu_custom_call.1} parent=1 // loop_footer
      %s21 = sadd.s32 1, %s17
    $region7: #{tpu_custom_call.1} parent=1 // loop_footer_branch
      %16 = sbr.rel target = $region3
    $region8: #{tpu_custom_call.1} parent=1 // loop_exit
      _
    %331 = vsyncpa [#allocation3], 1
    %s332 = scalar_lea.sflag [#allocation3], 1
    %333 = vsyncpa %s332, 1
    %334 = vsyncpa [#allocation6], 1
    %s335 = scalar_lea.sflag [#allocation6], 1
    %336 = vsyncpa %s335, 1
    %337 = vsyncpa [#allocation4], 1
    %s338 = scalar_lea.sflag [#allocation4], 1
    %339 = vsyncpa %s338, 1

</llo_original>
